<compile_context>
chip_gen: v7x
topology: tpu7x:2x2x1
jax: 0.10.0
libtpu: 0.0.40
codegen_flags: <defaults>
</compile_context>

<pallas_src>
import jax
import jax.numpy as jnp
from jax.experimental import pallas as pl
from jax.experimental.pallas import tpu as pltpu

NUM_FEATURES = 28 * 28   # 784
NUM_CLASSES = 10

_LANE = 128
_SUBLANE = 8
_DEFAULT_BLOCK_BATCH = 1024   # fits v5e's 16 MiB scoped-VMEM default with f32 x


def _round_up(x, m):
    return (x + m - 1) // m * m


def _logreg_kernel(x_ref, w_ref, b_ref, logits_ref, probas_ref):
    # Cast activations to the matmul dtype in-VMEM (no extra HBM pass), then
    # (TB, F) @ (F, Cp) on the MXU with f32 accumulation; bias broadcast add.
    x = x_ref[...].astype(w_ref.dtype)
    logits = jnp.dot(x, w_ref[...], preferred_element_type=jnp.float32)
    logits = logits + b_ref[...]                       # (TB, Cp) + (1, Cp), f32
    logits_ref[...] = logits.astype(logits_ref.dtype)

    # Numerically-stable softmax over the lane-dense class axis. Padded class
    # lanes already carry logits == -1e30 (baked into the bias at repack time,
    # weight's padded columns are zero), so exp() yields exactly 0 there --
    # no per-step iota/compare/select needed.
    m = jnp.max(logits, axis=1, keepdims=True)
    e = jnp.exp(logits - m)
    denom = jnp.sum(e, axis=1, keepdims=True)
    # EUP reciprocal: keeps the divide off the VPU slots. (~1e-3 relative on
    # the normalization; use approx=False if exact row-sums matter.)
    probas_ref[...] = (e * pl.reciprocal(denom, approx=True)).astype(
        probas_ref.dtype)


def prepare_params(weight, bias, compute_dtype=jnp.bfloat16):
    """One-time repack of torch-layout parameters into kernel layout.

    weight: (C, F) torch nn.Linear layout -> (F, Cp), Cp = round_up(C, 128),
            zero-padded columns, cast to the matmul dtype (bf16 by default).
    bias:   (C,) -> (1, Cp) f32, with -1e30 in the padded lanes so padded
            logits are -1e30 and their softmax probability is exactly 0.
    Do this once at init, NOT per forward call.
    """
    C, F = weight.shape
    Cp = _round_up(C, _LANE)
    w_packed = jnp.zeros((F, Cp), dtype=compute_dtype)
    w_packed = w_packed.at[:, :C].set(weight.T.astype(compute_dtype))
    b_packed = jnp.full((1, Cp), -1e30, dtype=jnp.float32)
    b_packed = b_packed.at[:, :C].set(bias.astype(jnp.float32))
    return w_packed, b_packed


def logistic_regression_forward(x, w_packed, b_packed,
                                num_classes=NUM_CLASSES,
                                block_batch=_DEFAULT_BLOCK_BATCH,
                                out_dtype=None):
    """x: (B, F) any float dtype; w_packed: (F, Cp); b_packed: (1, Cp)."""
    B, F = x.shape
    Fp, Cp = w_packed.shape
    assert Fp == F and b_packed.shape == (1, Cp)
    out_dtype = x.dtype if out_dtype is None else out_dtype

    # Batch tile: as large as possible to amortize the ~0.35us/step overhead,
    # but split into >= 2 grid steps for mid-sized batches so v7x's two
    # TensorCores both get work via the "parallel" grid axis.
    TB = block_batch
    if B < 2 * block_batch:
        TB = min(block_batch, max(_SUBLANE, _round_up(pl.cdiv(B, 2), _SUBLANE)))
    grid = (pl.cdiv(B, TB),)   # ragged last tile handled by Pallas (no jnp.pad)

    out_shapes = (
        jax.ShapeDtypeStruct((B, Cp), out_dtype),   # logits (lane-padded)
        jax.ShapeDtypeStruct((B, Cp), out_dtype),   # probas (lane-padded)
    )

    logits_p, probas_p = pl.pallas_call(
        _logreg_kernel,
        out_shape=out_shapes,
        grid_spec=pltpu.PrefetchScalarGridSpec(
            num_scalar_prefetch=0,
            grid=grid,
            in_specs=[
                pl.BlockSpec((TB, F), lambda i: (i, 0)),   # x: tiled over batch
                pl.BlockSpec((F, Cp), lambda i: (0, 0)),   # weight: resident
                pl.BlockSpec((1, Cp), lambda i: (0, 0)),   # bias: resident
            ],
            out_specs=[
                pl.BlockSpec((TB, Cp), lambda i: (i, 0)),
                pl.BlockSpec((TB, Cp), lambda i: (i, 0)),
            ],
        ),
        compiler_params=pltpu.CompilerParams(
            dimension_semantics=("parallel",),   # batch tiles are independent
        ),
    )(x, w_packed, b_packed)

    # Strip the lane padding of the class axis (keep this slice: the padded
    # class lanes hold -1e30 logits / 0 probas).
    return logits_p[:, :num_classes], probas_p[:, :num_classes]


if __name__ == "__main__":
    key = jax.random.PRNGKey(0)
    kx, kw, kb = jax.random.split(key, 3)

    batch = 8
    x = jax.random.normal(kx, (batch, NUM_FEATURES), dtype=jnp.float32)

    # Parameters exactly as the module's __init__: zero-initialized (torch layout).
    weight = jnp.zeros((NUM_CLASSES, NUM_FEATURES), dtype=jnp.float32)
    bias = jnp.zeros((NUM_CLASSES,), dtype=jnp.float32)

    w_packed, b_packed = prepare_params(weight, bias)   # bf16 compute by default
    logits, probas = logistic_regression_forward(x, w_packed, b_packed)
    jax.block_until_ready((logits, probas))

    ref_logits = jnp.dot(x, weight.T, precision=jax.lax.Precision.HIGHEST) + bias
    ref_probas = jax.nn.softmax(ref_logits, axis=1)
    assert logits.shape == (batch, NUM_CLASSES)
    assert probas.shape == (batch, NUM_CLASSES)
    assert jnp.allclose(logits, ref_logits, atol=1e-5)
    assert jnp.allclose(probas, ref_probas, atol=1e-3)

    # Non-trivial parameters, bf16 compute path (default): loose tolerance.
    weight2 = 0.01 * jax.random.normal(kw, (NUM_CLASSES, NUM_FEATURES),
                                       dtype=jnp.float32)
    bias2 = 0.01 * jax.random.normal(kb, (NUM_CLASSES,), dtype=jnp.float32)
    w2_packed, b2_packed = prepare_params(weight2, bias2)
    logits2, probas2 = logistic_regression_forward(x, w2_packed, b2_packed)
    jax.block_until_ready((logits2, probas2))

    ref_logits2 = jnp.dot(x, weight2.T, precision=jax.lax.Precision.HIGHEST) + bias2
    ref_probas2 = jax.nn.softmax(ref_logits2, axis=1)
    assert jnp.allclose(logits2, ref_logits2, rtol=2e-2, atol=2e-2)
    assert jnp.allclose(probas2, ref_probas2, rtol=2e-2, atol=2e-2)

    # Same parameters, f32 compute path: tighter tolerance.
    w2f, b2f = prepare_params(weight2, bias2, compute_dtype=jnp.float32)
    logits3, probas3 = logistic_regression_forward(x, w2f, b2f)
    jax.block_until_ready((logits3, probas3))
    assert jnp.allclose(logits3, ref_logits2, rtol=1e-2, atol=1e-2)
    assert jnp.allclose(probas3, ref_probas2, rtol=1e-2, atol=1e-2)

    print("KERNEL_OK")
</pallas_src>

<mosaic_0001>
module attributes {stable_mosaic.version = 11 : i64} {
  func.func @_logreg_kernel(%arg0: i32, %arg1: memref<8x784xf32, #tpu.memory_space<vmem>>, %arg2: memref<784x128xbf16, #tpu.memory_space<vmem>>, %arg3: memref<1x128xf32, #tpu.memory_space<vmem>>, %arg4: memref<8x128xf32, #tpu.memory_space<vmem>>, %arg5: memref<8x128xf32, #tpu.memory_space<vmem>>) attributes {dimension_semantics = [#tpu.dimension_semantics<parallel>], iteration_bounds = array<i64: 1>, scalar_prefetch = 0 : i64, scratch_operands = 0 : i64, tpu.core_type = #tpu.core_type<tc>, window_params = [{transform_indices = @transform_0, window_bounds = array<i64: 8, 784>}, {pipeline_mode = #tpu.pipeline_mode<synchronous>, transform_indices = @transform_1, window_bounds = array<i64: 784, 128>}, {pipeline_mode = #tpu.pipeline_mode<synchronous>, transform_indices = @transform_2, window_bounds = array<i64: 1, 128>}, {transform_indices = @transform_3, window_bounds = array<i64: 8, 128>}, {transform_indices = @transform_4, window_bounds = array<i64: 8, 128>}]} {
    %c0 = arith.constant 0 : index
    %c0_0 = arith.constant 0 : index
    %0 = vector.load %arg1[%c0, %c0_0] : memref<8x784xf32, #tpu.memory_space<vmem>>, vector<8x784xf32>
    %1 = arith.truncf %0 : vector<8x784xf32> to vector<8x784xbf16>
    %c0_1 = arith.constant 0 : index
    %c0_2 = arith.constant 0 : index
    %2 = vector.load %arg2[%c0_1, %c0_2] : memref<784x128xbf16, #tpu.memory_space<vmem>>, vector<784x128xbf16>
    %cst = arith.constant dense<0.000000e+00> : vector<8x128xf32>
    %3 = tpu.matmul %1, %2, %cst {dimension_numbers = #tpu.dot_dimension_numbers<[1], [0], [0], [1], [0, 0, 1, 1], [], []>} : vector<8x784xbf16>, vector<784x128xbf16>, vector<8x128xf32> -> vector<8x128xf32>
    %c0_3 = arith.constant 0 : index
    %c0_4 = arith.constant 0 : index
    %4 = vector.load %arg3[%c0_3, %c0_4] : memref<1x128xf32, #tpu.memory_space<vmem>>, vector<1x128xf32>
    %5 = vector.broadcast %4 : vector<1x128xf32> to vector<8x128xf32>
    %6 = arith.addf %3, %5 : vector<8x128xf32>
    %c0_5 = arith.constant 0 : index
    %c0_6 = arith.constant 0 : index
    %7 = vector.load %arg4[%c0_5, %c0_6] : memref<8x128xf32, #tpu.memory_space<vmem>>, vector<8x128xf32>
    tpu.vector_store %arg4[%c0_5, %c0_6], %6 {strides = array<i32>} : memref<8x128xf32, #tpu.memory_space<vmem>>, vector<8x128xf32>,
    %cst_7 = arith.constant dense<0xFF800000> : vector<8xf32>
    %8 = vector.multi_reduction <maximumf>, %6, %cst_7 [1] : vector<8x128xf32> to vector<8xf32>
    %9 = vector.shape_cast %8 : vector<8xf32> to vector<8x1xf32>
    %10 = vector.broadcast %9 : vector<8x1xf32> to vector<8x128xf32>
    %11 = arith.subf %6, %10 : vector<8x128xf32>
    %12 = math.exp %11 : vector<8x128xf32>
    %cst_8 = arith.constant dense<0.000000e+00> : vector<8xf32>
    %13 = vector.multi_reduction <add>, %12, %cst_8 [1] : vector<8x128xf32> to vector<8xf32>
    %14 = vector.shape_cast %13 : vector<8xf32> to vector<8x1xf32>
    %15 = tpu.reciprocal %14 {approx = true} : vector<8x1xf32> -> vector<8x1xf32>
    %16 = vector.broadcast %15 : vector<8x1xf32> to vector<8x128xf32>
    %17 = arith.mulf %12, %16 : vector<8x128xf32>
    %c0_9 = arith.constant 0 : index
    %c0_10 = arith.constant 0 : index
    %18 = vector.load %arg5[%c0_9, %c0_10] : memref<8x128xf32, #tpu.memory_space<vmem>>, vector<8x128xf32>
    tpu.vector_store %arg5[%c0_9, %c0_10], %17 {strides = array<i32>} : memref<8x128xf32, #tpu.memory_space<vmem>>, vector<8x128xf32>,
    return
  }
  func.func @transform_0(%arg0: i32) -> (i32, i32) {
    %c0_i32 = arith.constant 0 : i32
    %c0_i32_0 = arith.constant 0 : i32
    return %arg0, %c0_i32 : i32, i32
  }
  func.func @transform_1(%arg0: i32) -> (i32, i32) {
    %c0_i32 = arith.constant 0 : i32
    %c0_i32_0 = arith.constant 0 : i32
    %c0_i32_1 = arith.constant 0 : i32
    return %c0_i32, %c0_i32_0 : i32, i32
  }
  func.func @transform_2(%arg0: i32) -> (i32, i32) {
    %c0_i32 = arith.constant 0 : i32
    %c0_i32_0 = arith.constant 0 : i32
    %c0_i32_1 = arith.constant 0 : i32
    return %c0_i32, %c0_i32_0 : i32, i32
  }
  func.func @transform_3(%arg0: i32) -> (i32, i32) {
    %c0_i32 = arith.constant 0 : i32
    %c0_i32_0 = arith.constant 0 : i32
    return %arg0, %c0_i32 : i32, i32
  }
  func.func @transform_4(%arg0: i32) -> (i32, i32) {
    %c0_i32 = arith.constant 0 : i32
    %c0_i32_0 = arith.constant 0 : i32
    return %arg0, %c0_i32 : i32, i32
  }
}

</mosaic_0001>

<llo_original>
// kernel: tpu_custom_call.1
$region0: #{tpu_custom_call.1}
  #allocation0 [shape = 'u32[]', space=smem, size = 0x4, offset = 0x4, fixed_abs, tag = 'smem constant byte address 0x4 - core index']
  #allocation1 [shape = 'u32[144,128]{1,0:T(1,128)}', space=vmem, size = 0x12000, scoped, tag = 'internal scratch']
  %s0 = inlined_call_operand.hbm [shape: f32[8,784], index: 0, kind: input, shape index: {}]
  %s1 = inlined_call_operand.hbm [shape: bf16[784,128], index: 1, kind: input, shape index: {}]
  %s2 = inlined_call_operand.vmem [shape: f32[1,128], index: 2, kind: input, shape index: {}]
  %s3 = inlined_call_operand.hbm [shape: f32[8,128], index: 3, kind: output, shape index: {0}]
  %s4 = inlined_call_operand.hbm [shape: f32[8,128], index: 4, kind: output, shape index: {1}]
  %5 = xla_tuple %s3, %s4
  %s6 = sld [smem:[#allocation0]]
  $region38: #{tpu_custom_call.1} parent=0
    _
  %s8 = ssub.s32 1, %s6
  %s9 = scalar_select 0, %s8, %s6
  $region1: #{tpu_custom_call.1} parent=0
    #allocation2 [shape = 'u8[28672]{0}', space=vmem, size = 0x7000, scoped, tag = 'input window, operand 0, single buffered']
    #allocation3 [shape = 's32[1]{0}', space=sflag, size = 0x4, scoped, tag = 'scoped memory for tpu_custom_call.1']
    #allocation4 [shape = 's32[1]{0}', space=sflag, size = 0x4, scoped, tag = 'scoped memory for tpu_custom_call.1']
    #allocation5 [shape = 'u8[200704]{0}', space=vmem, size = 0x31000, scoped, tag = 'input window, operand 1, single buffered']
    #allocation6 [shape = 's32[1]{0}', space=sflag, size = 0x4, scoped, tag = 'scoped memory for tpu_custom_call.1']
    #allocation7 [shape = 'u8[4096]{0}', space=vmem, size = 0x1000, scoped, tag = 'output window, operand 0, single buffered']
    #allocation8 [shape = 'u8[4096]{0}', space=vmem, size = 0x1000, scoped, tag = 'output window, operand 1, single buffered']
    #allocation9 [shape = 's32[1]{0}', space=sflag, size = 0x4, scoped, tag = 'scoped memory for tpu_custom_call.1']
    %10 = vsyncpa [#allocation3], 0
    %11 = vsyncpa [#allocation6], 0
    %12 = vsyncpa [#allocation4], 0
    %13 = vsyncpa [#allocation9], 0
    // Predicated region
    $region2: #{tpu_custom_call.1} parent=1 // pred_check
      _
    $region3: #{tpu_custom_call.1} parent=1 // pred_check_branch
      %15 = sbr.rel (0) target = $region5
    $region4: #{tpu_custom_call.1} parent=1 // pred_region
      %s17 = ssub.s32 896, 896
      %18 = vsyncadd [#allocation3], %s17
      %s20 = sshll.u32 [#allocation2], 4
      %s21 = int_to_ptr.vmem [resolvable:$true] %s20
      %23 = dma.hbm_to_vmem [thread:$0]  %s0, 896, %s21, [#allocation3]
    $region5: #{tpu_custom_call.1} parent=1 // pred_fallthru
      _
    // Predicated region
    $region6: #{tpu_custom_call.1} parent=1 // pred_check
      _
    $region7: #{tpu_custom_call.1} parent=1 // pred_check_branch
      %25 = sbr.rel (0) target = $region9
    $region8: #{tpu_custom_call.1} parent=1 // pred_region
      %s27 = ssub.s32 6272, 6272
      %28 = vsyncadd [#allocation6], %s27
      %s29 = sshll.u32 [#allocation5], 4
      %s30 = int_to_ptr.vmem [resolvable:$true] %s29
      %35 = dma.hbm_to_vmem [thread:$0]  %s1, 6272, %s30, [#allocation6], 64, 64, 4
    $region9: #{tpu_custom_call.1} parent=1 // pred_fallthru
      _
    // Predicated region
    $region10: #{tpu_custom_call.1} parent=1 // pred_check
      _
    $region11: #{tpu_custom_call.1} parent=1 // pred_check_branch
      %37 = sbr.rel (0) target = $region13
    $region12: #{tpu_custom_call.1} parent=1 // pred_region
      _
    $region13: #{tpu_custom_call.1} parent=1 // pred_fallthru
      _
    // Predicated region
    $region14: #{tpu_custom_call.1} parent=1 // pred_check
      _
    $region15: #{tpu_custom_call.1} parent=1 // pred_check_branch
      %39 = sbr.rel (0) target = $region17
    $region16: #{tpu_custom_call.1} parent=1 // pred_region
      %40 = dma.done [#allocation3], 896
    $region17: #{tpu_custom_call.1} parent=1 // pred_fallthru
      _
    // Predicated region
    $region18: #{tpu_custom_call.1} parent=1 // pred_check
      _
    $region19: #{tpu_custom_call.1} parent=1 // pred_check_branch
      %42 = sbr.rel (0) target = $region21
    $region20: #{tpu_custom_call.1} parent=1 // pred_region
      %43 = dma.done [#allocation6], 6272
    $region21: #{tpu_custom_call.1} parent=1 // pred_fallthru
      _
    %v45 = vld [vmem:[#allocation2] sm:$0xff]
    %v46 = vld [vmem:[#allocation2 + $0x8] sm:$0xff]
    %v47 = vld [vmem:[#allocation2 + $0x10] sm:$0xff]
    %v48 = vld [vmem:[#allocation2 + $0x18] sm:$0xff]
    %v49 = vld [vmem:[#allocation2 + $0x20] sm:$0xff]
    %v50 = vld [vmem:[#allocation2 + $0x28] sm:$0xff]
    %v51 = vld [vmem:[#allocation2 + $0x30] sm:$0xff]
    %v52 = vpack.c.bf16 %v45, %v45
    %v53 = vpack.c.bf16 %v46, %v46
    %v54 = vpack.c.bf16 %v47, %v47
    %v55 = vpack.c.bf16 %v48, %v48
    %v56 = vpack.c.bf16 %v49, %v49
    %v57 = vpack.c.bf16 %v50, %v50
    %v58 = vpack.c.bf16 %v51, %v51
    %v59 = vld [vmem:[#allocation5] sm:$0xf]
    %v60 = vld [vmem:[#allocation5 + $0x4] sm:$0xf]
    %v61 = vld [vmem:[#allocation5 + $0x8] sm:$0xf]
    %v62 = vld [vmem:[#allocation5 + $0xc] sm:$0xf]
    %v63 = vld [vmem:[#allocation5 + $0x10] sm:$0xf]
    %v64 = vld [vmem:[#allocation5 + $0x14] sm:$0xf]
    %v65 = vld [vmem:[#allocation5 + $0x18] sm:$0xf]
    %v66 = vld [vmem:[#allocation5 + $0x1c] sm:$0xf]
    %v67 = vld [vmem:[#allocation5 + $0x20] sm:$0xf]
    %v68 = vld [vmem:[#allocation5 + $0x24] sm:$0xf]
    %v69 = vld [vmem:[#allocation5 + $0x28] sm:$0xf]
    %v70 = vld [vmem:[#allocation5 + $0x2c] sm:$0xf]
    %v71 = vld [vmem:[#allocation5 + $0x30] sm:$0xf]
    %v72 = vld [vmem:[#allocation5 + $0x34] sm:$0xf]
    %v73 = vld [vmem:[#allocation5 + $0x38] sm:$0xf]
    %v74 = vld [vmem:[#allocation5 + $0x3c] sm:$0xf]
    %v75 = vld [vmem:[#allocation5 + $0x40] sm:$0xf]
    %v76 = vld [vmem:[#allocation5 + $0x44] sm:$0xf]
    %v77 = vld [vmem:[#allocation5 + $0x48] sm:$0xf]
    %v78 = vld [vmem:[#allocation5 + $0x4c] sm:$0xf]
    %v79 = vld [vmem:[#allocation5 + $0x50] sm:$0xf]
    %v80 = vld [vmem:[#allocation5 + $0x54] sm:$0xf]
    %v81 = vld [vmem:[#allocation5 + $0x58] sm:$0xf]
    %v82 = vld [vmem:[#allocation5 + $0x5c] sm:$0xf]
    %v83 = vld [vmem:[#allocation5 + $0x60] sm:$0xf]
    %v84 = vld [vmem:[#allocation5 + $0x64] sm:$0xf]
    %v85 = vld [vmem:[#allocation5 + $0x68] sm:$0xf]
    %v86 = vld [vmem:[#allocation5 + $0x6c] sm:$0xf]
    %v87 = vld [vmem:[#allocation5 + $0x70] sm:$0xf]
    %v88 = vld [vmem:[#allocation5 + $0x74] sm:$0xf]
    %v89 = vld [vmem:[#allocation5 + $0x78] sm:$0xf]
    %v90 = vld [vmem:[#allocation5 + $0x7c] sm:$0xf]
    %v91 = vld [vmem:[#allocation5 + $0x80] sm:$0xf]
    %v92 = vld [vmem:[#allocation5 + $0x84] sm:$0xf]
    %v93 = vld [vmem:[#allocation5 + $0x88] sm:$0xf]
    %v94 = vld [vmem:[#allocation5 + $0x8c] sm:$0xf]
    %v95 = vld [vmem:[#allocation5 + $0x90] sm:$0xf]
    %v96 = vld [vmem:[#allocation5 + $0x94] sm:$0xf]
    %v97 = vld [vmem:[#allocation5 + $0x98] sm:$0xf]
    %v98 = vld [vmem:[#allocation5 + $0x9c] sm:$0xf]
    %v99 = vld [vmem:[#allocation5 + $0xa0] sm:$0xf]
    %v100 = vld [vmem:[#allocation5 + $0xa4] sm:$0xf]
    %v101 = vld [vmem:[#allocation5 + $0xa8] sm:$0xf]
    %v102 = vld [vmem:[#allocation5 + $0xac] sm:$0xf]
    %v103 = vld [vmem:[#allocation5 + $0xb0] sm:$0xf]
    %v104 = vld [vmem:[#allocation5 + $0xb4] sm:$0xf]
    %v105 = vld [vmem:[#allocation5 + $0xb8] sm:$0xf]
    %v106 = vld [vmem:[#allocation5 + $0xbc] sm:$0xf]
    %v107 = vld [vmem:[#allocation5 + $0xc0] sm:$0xf]
    %v108 = vld [vmem:[#allocation5 + $0xc4] sm:$0xf]
    %v109 = vld [vmem:[#allocation5 + $0xc8] sm:$0xf]
    %v110 = vld [vmem:[#allocation5 + $0xcc] sm:$0xf]
    %v111 = vld [vmem:[#allocation5 + $0xd0] sm:$0xf]
    %v112 = vld [vmem:[#allocation5 + $0xd4] sm:$0xf]
    %v113 = vld [vmem:[#allocation5 + $0xd8] sm:$0xf]
    %v114 = vld [vmem:[#allocation5 + $0xdc] sm:$0xf]
    %v115 = vld [vmem:[#allocation5 + $0xe0] sm:$0xf]
    %v116 = vld [vmem:[#allocation5 + $0xe4] sm:$0xf]
    %v117 = vld [vmem:[#allocation5 + $0xe8] sm:$0xf]
    %v118 = vld [vmem:[#allocation5 + $0xec] sm:$0xf]
    %v119 = vld [vmem:[#allocation5 + $0xf0] sm:$0xf]
    %v120 = vld [vmem:[#allocation5 + $0xf4] sm:$0xf]
    %v121 = vld [vmem:[#allocation5 + $0xf8] sm:$0xf]
    %v122 = vld [vmem:[#allocation5 + $0xfc] sm:$0xf]
    %v123 = vld [vmem:[#allocation5 + $0x100] sm:$0xf]
    %v124 = vld [vmem:[#allocation5 + $0x104] sm:$0xf]
    %v125 = vld [vmem:[#allocation5 + $0x108] sm:$0xf]
    %v126 = vld [vmem:[#allocation5 + $0x10c] sm:$0xf]
    %v127 = vld [vmem:[#allocation5 + $0x110] sm:$0xf]
    %v128 = vld [vmem:[#allocation5 + $0x114] sm:$0xf]
    %v129 = vld [vmem:[#allocation5 + $0x118] sm:$0xf]
    %v130 = vld [vmem:[#allocation5 + $0x11c] sm:$0xf]
    %v131 = vld [vmem:[#allocation5 + $0x120] sm:$0xf]
    %v132 = vld [vmem:[#allocation5 + $0x124] sm:$0xf]
    %v133 = vld [vmem:[#allocation5 + $0x128] sm:$0xf]
    %v134 = vld [vmem:[#allocation5 + $0x12c] sm:$0xf]
    %v135 = vld [vmem:[#allocation5 + $0x130] sm:$0xf]
    %v136 = vld [vmem:[#allocation5 + $0x134] sm:$0xf]
    %v137 = vld [vmem:[#allocation5 + $0x138] sm:$0xf]
    %v138 = vld [vmem:[#allocation5 + $0x13c] sm:$0xf]
    %v139 = vld [vmem:[#allocation5 + $0x140] sm:$0xf]
    %v140 = vld [vmem:[#allocation5 + $0x144] sm:$0xf]
    %v141 = vld [vmem:[#allocation5 + $0x148] sm:$0xf]
    %v142 = vld [vmem:[#allocation5 + $0x14c] sm:$0xf]
    %v143 = vld [vmem:[#allocation5 + $0x150] sm:$0xf]
    %v144 = vld [vmem:[#allocation5 + $0x154] sm:$0xf]
    %v145 = vld [vmem:[#allocation5 + $0x158] sm:$0xf]
    %v146 = vld [vmem:[#allocation5 + $0x15c] sm:$0xf]
    %v147 = vld [vmem:[#allocation5 + $0x160] sm:$0xf]
    %v148 = vld [vmem:[#allocation5 + $0x164] sm:$0xf]
    %v149 = vld [vmem:[#allocation5 + $0x168] sm:$0xf]
    %v150 = vld [vmem:[#allocation5 + $0x16c] sm:$0xf]
    %v151 = vld [vmem:[#allocation5 + $0x170] sm:$0xf]
    %v152 = vld [vmem:[#allocation5 + $0x174] sm:$0xf]
    %v153 = vld [vmem:[#allocation5 + $0x178] sm:$0xf]
    %v154 = vld [vmem:[#allocation5 + $0x17c] sm:$0xf]
    %v155 = vld [vmem:[#allocation5 + $0x180] sm:$0xf]
    %v156 = vld [vmem:[#allocation5 + $0x184] sm:$0xf]
    %v157 = vld [vmem:[%s2] sm:$0x1]
    %v159 = vlaneseq
    %v160 = vshrl.u32 %v159, 7
    %v161 = vsub.s32 0, %v160
    %v162 = vrot.slane %v157, %v161
    %v262 = vunpack.c.l.b16 %v59
    %v263 = vunpack.c.l.b16 %v60
    %v264 = vunpack.c.l.b16 %v61
    %v265 = vunpack.c.l.b16 %v62
    %v266 = vunpack.c.l.b16 %v63
    %v267 = vunpack.c.l.b16 %v64
    %v268 = vunpack.c.l.b16 %v65
    %v269 = vunpack.c.l.b16 %v66
    %v270 = vunpack.c.l.b16 %v67
    %v271 = vunpack.c.l.b16 %v68
    %v272 = vunpack.c.l.b16 %v69
    %v273 = vunpack.c.l.b16 %v70
    %v274 = vunpack.c.l.b16 %v71
    %v275 = vunpack.c.l.b16 %v72
    %v276 = vunpack.c.l.b16 %v73
    %v277 = vunpack.c.l.b16 %v74
    %v278 = vunpack.c.l.b16 %v75
    %v279 = vunpack.c.l.b16 %v76
    %v280 = vunpack.c.l.b16 %v77
    %v281 = vunpack.c.l.b16 %v78
    %v282 = vunpack.c.l.b16 %v79
    %v283 = vunpack.c.l.b16 %v80
    %v284 = vunpack.c.l.b16 %v81
    %v285 = vunpack.c.l.b16 %v82
    %v286 = vunpack.c.l.b16 %v83
    %v287 = vunpack.c.l.b16 %v84
    %v288 = vunpack.c.l.b16 %v85
    %v289 = vunpack.c.l.b16 %v86
    %v290 = vunpack.c.l.b16 %v87
    %v291 = vunpack.c.l.b16 %v88
    %v292 = vunpack.c.l.b16 %v89
    %v293 = vunpack.c.l.b16 %v90
    %v294 = vunpack.c.l.b16 %v91
    %v295 = vunpack.c.l.b16 %v92
    %v296 = vunpack.c.l.b16 %v93
    %v297 = vunpack.c.l.b16 %v94
    %v298 = vunpack.c.l.b16 %v95
    %v299 = vunpack.c.l.b16 %v96
    %v300 = vunpack.c.l.b16 %v97
    %v301 = vunpack.c.l.b16 %v98
    %v302 = vunpack.c.l.b16 %v99
    %v303 = vunpack.c.l.b16 %v100
    %v304 = vunpack.c.l.b16 %v101
    %v305 = vunpack.c.l.b16 %v102
    %v306 = vunpack.c.l.b16 %v103
    %v307 = vunpack.c.l.b16 %v104
    %v308 = vunpack.c.l.b16 %v105
    %v309 = vunpack.c.l.b16 %v106
    %v310 = vunpack.c.l.b16 %v107
    %v311 = vunpack.c.l.b16 %v108
    %v312 = vunpack.c.l.b16 %v109
    %v313 = vunpack.c.l.b16 %v110
    %v314 = vunpack.c.l.b16 %v111
    %v315 = vunpack.c.l.b16 %v112
    %v316 = vunpack.c.l.b16 %v113
    %v317 = vunpack.c.l.b16 %v114
    %v318 = vunpack.c.l.b16 %v115
    %v319 = vunpack.c.l.b16 %v116
    %v320 = vunpack.c.l.b16 %v117
    %v321 = vunpack.c.l.b16 %v118
    %v322 = vunpack.c.l.b16 %v119
    %v323 = vunpack.c.l.b16 %v120
    %v324 = vunpack.c.l.b16 %v121
    %v325 = vunpack.c.l.b16 %v122
    %v326 = vunpack.c.l.b16 %v123
    %v327 = vunpack.c.l.b16 %v124
    %v328 = vunpack.c.l.b16 %v125
    %v329 = vunpack.c.l.b16 %v126
    %v330 = vunpack.c.l.b16 %v127
    %v331 = vunpack.c.l.b16 %v128
    %v332 = vunpack.c.l.b16 %v129
    %v333 = vunpack.c.l.b16 %v130
    %v334 = vunpack.c.l.b16 %v131
    %v335 = vunpack.c.l.b16 %v132
    %v336 = vunpack.c.l.b16 %v133
    %v337 = vunpack.c.l.b16 %v134
    %v338 = vunpack.c.l.b16 %v135
    %v339 = vunpack.c.l.b16 %v136
    %v340 = vunpack.c.l.b16 %v137
    %v341 = vunpack.c.l.b16 %v138
    %v342 = vunpack.c.l.b16 %v139
    %v343 = vunpack.c.l.b16 %v140
    %v344 = vunpack.c.l.b16 %v141
    %v345 = vunpack.c.l.b16 %v142
    %v346 = vunpack.c.l.b16 %v143
    %v347 = vunpack.c.l.b16 %v144
    %v348 = vunpack.c.l.b16 %v145
    %v349 = vunpack.c.l.b16 %v146
    %v350 = vunpack.c.l.b16 %v147
    %v351 = vunpack.c.l.b16 %v148
    %v352 = vunpack.c.l.b16 %v149
    %v353 = vunpack.c.l.b16 %v150
    %v354 = vunpack.c.l.b16 %v151
    %v355 = vunpack.c.l.b16 %v152
    %v356 = vunpack.c.l.b16 %v153
    %v357 = vunpack.c.l.b16 %v154
    %v358 = vunpack.c.l.b16 %v155
    %v359 = vunpack.c.l.b16 %v156
    %v360 = vpack.c.b16 %v263, %v262
    %v361 = vpack.c.b16 %v265, %v264
    %v362 = vpack.c.b16 %v267, %v266
    %v363 = vpack.c.b16 %v269, %v268
    %v364 = vpack.c.b16 %v271, %v270
    %v365 = vpack.c.b16 %v273, %v272
    %v366 = vpack.c.b16 %v275, %v274
    %v367 = vpack.c.b16 %v277, %v276
    %v368 = vpack.c.b16 %v279, %v278
    %v369 = vpack.c.b16 %v281, %v280
    %v370 = vpack.c.b16 %v283, %v282
    %v371 = vpack.c.b16 %v285, %v284
    %v372 = vpack.c.b16 %v287, %v286
    %v373 = vpack.c.b16 %v289, %v288
    %v374 = vpack.c.b16 %v291, %v290
    %v375 = vpack.c.b16 %v293, %v292
    %v376 = vpack.c.b16 %v295, %v294
    %v377 = vpack.c.b16 %v297, %v296
    %v378 = vpack.c.b16 %v299, %v298
    %v379 = vpack.c.b16 %v301, %v300
    %v380 = vpack.c.b16 %v303, %v302
    %v381 = vpack.c.b16 %v305, %v304
    %v382 = vpack.c.b16 %v307, %v306
    %v383 = vpack.c.b16 %v309, %v308
    %v384 = vpack.c.b16 %v311, %v310
    %v385 = vpack.c.b16 %v313, %v312
    %v386 = vpack.c.b16 %v315, %v314
    %v387 = vpack.c.b16 %v317, %v316
    %v388 = vpack.c.b16 %v319, %v318
    %v389 = vpack.c.b16 %v321, %v320
    %v390 = vpack.c.b16 %v323, %v322
    %v391 = vpack.c.b16 %v325, %v324
    %v392 = vpack.c.b16 %v327, %v326
    %v393 = vpack.c.b16 %v329, %v328
    %v394 = vpack.c.b16 %v331, %v330
    %v395 = vpack.c.b16 %v333, %v332
    %v396 = vpack.c.b16 %v335, %v334
    %v397 = vpack.c.b16 %v337, %v336
    %v398 = vpack.c.b16 %v339, %v338
    %v399 = vpack.c.b16 %v341, %v340
    %v400 = vpack.c.b16 %v343, %v342
    %v401 = vpack.c.b16 %v345, %v344
    %v402 = vpack.c.b16 %v347, %v346
    %v403 = vpack.c.b16 %v349, %v348
    %v404 = vpack.c.b16 %v351, %v350
    %v405 = vpack.c.b16 %v353, %v352
    %v406 = vpack.c.b16 %v355, %v354
    %v407 = vpack.c.b16 %v357, %v356
    %v408 = vpack.c.b16 %v359, %v358
    %vm458 = vcmask 130048
    %v460 = vsel %vm458, %v58, 0
    %462 = vmatprep.subr.bf16.mxu0 0
    %463 = vmatpush1.bf16.msra.mxu0 %v360
    %464 = vmatprep.subr.bf16.mxu0 0
    %465 = vmatpush1.bf16.msra.mxu0 %v361
    %466 = vmatprep.subr.bf16.mxu0 0
    %467 = vmatpush1.bf16.msra.mxu0 %v362
    %468 = vmatprep.subr.bf16.mxu0 0
    %469 = vmatpush1.bf16.msra.mxu0 %v363
    %470 = vmatprep.subr.bf16.mxu0 0
    %471 = vmatpush1.bf16.msra.mxu0 %v364
    %472 = vmatprep.subr.bf16.mxu0 0
    %473 = vmatpush1.bf16.msra.mxu0 %v365
    %474 = vmatprep.subr.bf16.mxu0 0
    %475 = vmatpush1.bf16.msra.mxu0 %v366
    %476 = vmatprep.subr.bf16.mxu0 0
    %477 = vmatpush1.bf16.msra.mxu0 %v367
    %478 = vmatprep.subr.bf16.mxu0 0
    %479 = vmatpush1.bf16.msra.mxu0 %v368
    %480 = vmatprep.subr.bf16.mxu0 0
    %481 = vmatpush1.bf16.msra.mxu0 %v369
    %482 = vmatprep.subr.bf16.mxu0 0
    %483 = vmatpush1.bf16.msra.mxu0 %v370
    %484 = vmatprep.subr.bf16.mxu0 0
    %485 = vmatpush1.bf16.msra.mxu0 %v371
    %486 = vmatprep.subr.bf16.mxu0 0
    %487 = vmatpush1.bf16.msra.mxu0 %v372
    %488 = vmatprep.subr.bf16.mxu0 0
    %489 = vmatpush1.bf16.msra.mxu0 %v373
    %490 = vmatprep.subr.bf16.mxu0 0
    %491 = vmatpush1.bf16.msra.mxu0 %v374
    %492 = vmatprep.subr.bf16.mxu0 0
    %493 = vmatpush1.bf16.msra.mxu0 %v375
    %494 = vmatprep.mubr.bf16.mxu0 %v53
    %495 = vmatmul.mubr.bf16.gmra.mrb[0].mxu0 %v52
    %v496 = vpop.f32.mrb[0].mxu0
    %v497 = vadd.f32 %v162, %v496
    %v498 = vpop.f32.mrb[0].mxu0
    %v499 = vpop.f32.mrb[0].mxu0
    %v500 = vpop.f32.mrb[0].mxu0
    %501 = vdwg.mxu0
    %502 = vmatprep.subr.bf16.mxu0 0
    %503 = vmatpush1.bf16.msra.mxu0 %v376
    %504 = vmatprep.subr.bf16.mxu0 0
    %505 = vmatpush1.bf16.msra.mxu0 %v377
    %506 = vmatprep.subr.bf16.mxu0 0
    %507 = vmatpush1.bf16.msra.mxu0 %v378
    %508 = vmatprep.subr.bf16.mxu0 0
    %509 = vmatpush1.bf16.msra.mxu0 %v379
    %510 = vmatprep.subr.bf16.mxu0 0
    %511 = vmatpush1.bf16.msra.mxu0 %v380
    %512 = vmatprep.subr.bf16.mxu0 0
    %513 = vmatpush1.bf16.msra.mxu0 %v381
    %514 = vmatprep.subr.bf16.mxu0 0
    %515 = vmatpush1.bf16.msra.mxu0 %v382
    %516 = vmatprep.subr.bf16.mxu0 0
    %517 = vmatpush1.bf16.msra.mxu0 %v383
    %518 = vmatprep.subr.bf16.mxu0 0
    %519 = vmatpush1.bf16.msra.mxu0 %v384
    %520 = vmatprep.subr.bf16.mxu0 0
    %521 = vmatpush1.bf16.msra.mxu0 %v385
    %522 = vmatprep.subr.bf16.mxu0 0
    %523 = vmatpush1.bf16.msra.mxu0 %v386
    %524 = vmatprep.subr.bf16.mxu0 0
    %525 = vmatpush1.bf16.msra.mxu0 %v387
    %526 = vmatprep.subr.bf16.mxu0 0
    %527 = vmatpush1.bf16.msra.mxu0 %v388
    %528 = vmatprep.subr.bf16.mxu0 0
    %529 = vmatpush1.bf16.msra.mxu0 %v389
    %530 = vmatprep.subr.bf16.mxu0 0
    %531 = vmatpush1.bf16.msra.mxu0 %v390
    %532 = vmatprep.subr.bf16.mxu0 0
    %533 = vmatpush1.bf16.msra.mxu0 %v391
    %534 = vmatprep.mubr.bf16.mxu0 %v55
    %535 = vmatmul.mubr.bf16.gmra.mrb[0].mxu0 %v54
    %v536 = vpop.f32.mrb[0].mxu0
    %v537 = vadd.f32 %v497, %v536
    %v538 = vpop.f32.mrb[0].mxu0
    %v539 = vpop.f32.mrb[0].mxu0
    %v540 = vpop.f32.mrb[0].mxu0
    %541 = vdwg.mxu0
    %542 = vmatprep.subr.bf16.mxu0 0
    %543 = vmatpush1.bf16.msra.mxu0 %v392
    %544 = vmatprep.subr.bf16.mxu0 0
    %545 = vmatpush1.bf16.msra.mxu0 %v393
    %546 = vmatprep.subr.bf16.mxu0 0
    %547 = vmatpush1.bf16.msra.mxu0 %v394
    %548 = vmatprep.subr.bf16.mxu0 0
    %549 = vmatpush1.bf16.msra.mxu0 %v395
    %550 = vmatprep.subr.bf16.mxu0 0
    %551 = vmatpush1.bf16.msra.mxu0 %v396
    %552 = vmatprep.subr.bf16.mxu0 0
    %553 = vmatpush1.bf16.msra.mxu0 %v397
    %554 = vmatprep.subr.bf16.mxu0 0
    %555 = vmatpush1.bf16.msra.mxu0 %v398
    %556 = vmatprep.subr.bf16.mxu0 0
    %557 = vmatpush1.bf16.msra.mxu0 %v399
    %558 = vmatprep.subr.bf16.mxu0 0
    %559 = vmatpush1.bf16.msra.mxu0 %v400
    %560 = vmatprep.subr.bf16.mxu0 0
    %561 = vmatpush1.bf16.msra.mxu0 %v401
    %562 = vmatprep.subr.bf16.mxu0 0
    %563 = vmatpush1.bf16.msra.mxu0 %v402
    %564 = vmatprep.subr.bf16.mxu0 0
    %565 = vmatpush1.bf16.msra.mxu0 %v403
    %566 = vmatprep.subr.bf16.mxu0 0
    %567 = vmatpush1.bf16.msra.mxu0 %v404
    %568 = vmatprep.subr.bf16.mxu0 0
    %569 = vmatpush1.bf16.msra.mxu0 %v405
    %570 = vmatprep.subr.bf16.mxu0 0
    %571 = vmatpush1.bf16.msra.mxu0 %v406
    %572 = vmatprep.subr.bf16.mxu0 0
    %573 = vmatpush1.bf16.msra.mxu0 %v407
    %574 = vmatprep.mubr.bf16.mxu0 %v57
    %575 = vmatmul.mubr.bf16.gmra.mrb[0].mxu0 %v56
    %v576 = vpop.f32.mrb[0].mxu0
    %v577 = vadd.f32 %v537, %v576
    %v578 = vpop.f32.mrb[0].mxu0
    %v579 = vpop.f32.mrb[0].mxu0
    %v580 = vpop.f32.mrb[0].mxu0
    %581 = vdwg.mxu0
    %582 = vmatprep.subr.bf16.mxu0 0
    %583 = vmatpush1.bf16.msra.mxu0 %v408
    %584 = vmatprep.subr.bf16.mxu0 0
    %585 = vmatpush1.bf16.msra.mxu0 0
    %586 = vmatprep.subr.bf16.mxu0 0
    %587 = vmatpush1.bf16.msra.mxu0 0
    %588 = vmatprep.subr.bf16.mxu0 0
    %589 = vmatpush1.bf16.msra.mxu0 0
    %590 = vmatprep.subr.bf16.mxu0 0
    %591 = vmatpush1.bf16.msra.mxu0 0
    %592 = vmatprep.subr.bf16.mxu0 0
    %593 = vmatpush1.bf16.msra.mxu0 0
    %594 = vmatprep.subr.bf16.mxu0 0
    %595 = vmatpush1.bf16.msra.mxu0 0
    %596 = vmatprep.subr.bf16.mxu0 0
    %597 = vmatpush1.bf16.msra.mxu0 0
    %598 = vmatprep.subr.bf16.mxu0 0
    %599 = vmatpush1.bf16.msra.mxu0 0
    %600 = vmatprep.subr.bf16.mxu0 0
    %601 = vmatpush1.bf16.msra.mxu0 0
    %602 = vmatprep.subr.bf16.mxu0 0
    %603 = vmatpush1.bf16.msra.mxu0 0
    %604 = vmatprep.subr.bf16.mxu0 0
    %605 = vmatpush1.bf16.msra.mxu0 0
    %606 = vmatprep.subr.bf16.mxu0 0
    %607 = vmatpush1.bf16.msra.mxu0 0
    %608 = vmatprep.subr.bf16.mxu0 0
    %609 = vmatpush1.bf16.msra.mxu0 0
    %610 = vmatprep.subr.bf16.mxu0 0
    %611 = vmatpush1.bf16.msra.mxu0 0
    %612 = vmatprep.subr.bf16.mxu0 0
    %613 = vmatpush1.bf16.msra.mxu0 0
    %614 = vmatprep.mubr.bf16.mxu0 0
    %615 = vmatmul.mubr.bf16.gmra.mrb[0].mxu0 %v460
    %v616 = vpop.f32.mrb[0].mxu0
    %v617 = vadd.f32 %v577, %v616
    %v618 = vpop.f32.mrb[0].mxu0
    %v619 = vpop.f32.mrb[0].mxu0
    %v620 = vpop.f32.mrb[0].mxu0
    %621 = vdwg.mxu0
    %622 = vst [vmem:[#allocation7] sm:$0xff] %v617
    %623 = vmax.xlane.f32.xlu0 %v617
    %v624 = vpop.xlane.xlu0 %623
    %v625 = vsub.f32 %v617, %v624
    %v626 = vmul.f32 %v625, 1.442695
    %v627 = vpow.pop %v626
    %628 = vadd.xlane.f32.xlu0 %v627
    %v629 = vpop.xlane.xlu0 %628
    %v630 = vrcp.pop %v629
    %v631 = vmul.f32 %v627, %v630
    %632 = vst [vmem:[#allocation8] sm:$0xff] %v631
    // Predicated region
    $region22: #{tpu_custom_call.1} parent=1 // pred_check
      _
    $region23: #{tpu_custom_call.1} parent=1 // pred_check_branch
      %634 = sbr.rel (0) target = $region25
    $region24: #{tpu_custom_call.1} parent=1 // pred_region
      %s636 = ssub.s32 128, 128
      %637 = vsyncadd [#allocation4], %s636
      %s639 = sshll.u32 [#allocation7], 4
      %s640 = int_to_ptr.vmem [resolvable:$true] %s639
      %642 = dma.vmem_to_hbm [thread:$0]  %s640, 128, %s3, [#allocation4]
    $region25: #{tpu_custom_call.1} parent=1 // pred_fallthru
      _
    // Predicated region
    $region26: #{tpu_custom_call.1} parent=1 // pred_check
      _
    $region27: #{tpu_custom_call.1} parent=1 // pred_check_branch
      %644 = sbr.rel (0) target = $region29
    $region28: #{tpu_custom_call.1} parent=1 // pred_region
      %s646 = ssub.s32 128, 128
      %647 = vsyncadd [#allocation9], %s646
      %s649 = sshll.u32 [#allocation8], 4
      %s650 = int_to_ptr.vmem [resolvable:$true] %s649
      %652 = dma.vmem_to_hbm [thread:$0]  %s650, 128, %s4, [#allocation9]
    $region29: #{tpu_custom_call.1} parent=1 // pred_fallthru
      _
    // Predicated region
    $region30: #{tpu_custom_call.1} parent=1 // pred_check
      _
    $region31: #{tpu_custom_call.1} parent=1 // pred_check_branch
      %654 = sbr.rel (0) target = $region33
    $region32: #{tpu_custom_call.1} parent=1 // pred_region
      %655 = dma.done [#allocation4], 128
    $region33: #{tpu_custom_call.1} parent=1 // pred_fallthru
      _
    // Predicated region
    $region34: #{tpu_custom_call.1} parent=1 // pred_check
      _
    $region35: #{tpu_custom_call.1} parent=1 // pred_check_branch
      %657 = sbr.rel (0) target = $region37
    $region36: #{tpu_custom_call.1} parent=1 // pred_region
      %658 = dma.done [#allocation9], 128
    $region37: #{tpu_custom_call.1} parent=1 // pred_fallthru
      _
    %659 = vsyncpa [#allocation3], 1
    %660 = vsyncpa [#allocation6], 1
    %661 = vsyncpa [#allocation4], 1
    %662 = vsyncpa [#allocation9], 1

</llo_original>
